<compile_context>
chip_gen: v6e
topology: v6e:2x2x1
jax: 0.10.0
libtpu: 0.0.40
codegen_flags: <defaults>
</compile_context>

<pallas_src>
import jax
import jax.numpy as jnp
from jax.experimental import pallas as pl
from jax.experimental.pallas import tpu as pltpu


# ----------------------------- kernels --------------------------------------


def _stats_kernel(x1_ref, x2_ref, w1_ref, w2_ref, y_ref, part_ref):
    """Pass 1: relu -> two 1x1-conv matmuls -> full-width y + per-tile stats."""
    y1 = jnp.dot(jnp.maximum(x1_ref[...], 0), w1_ref[...],
                 preferred_element_type=jnp.float32)           # (m, C_half) f32
    y2 = jnp.dot(jnp.maximum(x2_ref[...], 0), w2_ref[...],
                 preferred_element_type=jnp.float32)           # (m, C_half) f32
    y = jnp.concatenate([y1, y2], axis=-1)                     # (m, C_out) f32, in regs
    # Partials from the f32 values (before any downcast of the stored y tile).
    s = jnp.sum(y, axis=0, keepdims=True)                      # (1, C_out)
    q = jnp.sum(y * y, axis=0, keepdims=True)                  # (1, C_out)
    part_ref[0] = jnp.concatenate([s, q], axis=-1)             # (1, 2*C_out)
    y_ref[...] = y.astype(y_ref.dtype)                         # one lane-dense store


def _normalize_kernel(y_ref, scale_ref, shift_ref, o_ref):
    """Pass 2: o = y * scale + shift (scale/shift fold gamma/beta/mean/inv_std)."""
    y = y_ref[...].astype(jnp.float32)
    o_ref[...] = (y * scale_ref[...] + shift_ref[...]).astype(o_ref.dtype)


# ----------------------------- helpers --------------------------------------


def _round_up(v, m):
    return ((v + m - 1) // m) * m


def _pad_rows(a, rows):
    if a.shape[0] == rows:
        return a
    return jnp.pad(a, ((0, rows - a.shape[0]), (0, 0)))


def _vmem_limit_bytes():
    """Generation-aware scoped-VMEM budget.

    Keep the double-buffered working set well inside physical VMEM:
    v5e/v6e have 128 MiB per TensorCore (cap at 64 MiB — plenty), v7x only
    64 MiB (0.7x -> ~45 MiB, leaving pipelining headroom).
    """
    cap = 64 << 20
    try:
        info = pltpu.get_tpu_info()
        cap = int(getattr(info, "vmem_capacity_bytes", 0)) or cap
    except Exception:
        pass
    return min(int(cap * 0.7), 64 << 20)


def _pick_tiles(M, row1_bytes, row2_bytes, gran, m_tile, vmem_limit):
    """Pick pass-1 tile m1 and pass-2 tile m2 (a multiple of m1)."""
    # Streamed tiles are double-buffered by the pipeline; target ~40% of the
    # VMEM limit for one in-flight working set.
    stream_budget = int(vmem_limit * 0.4)
    if m_tile is None:
        m_tile = min(stream_budget // max(row1_bytes, 1), 8192)
    m1 = max(gran, (min(m_tile, _round_up(M, gran)) // gran) * gran)
    # Pass-2 rows are much thinner -> larger tile, kept a multiple of m1.
    t2 = (stream_budget // max(row2_bytes, 1) // m1) * m1
    t2 = max(m1, min(t2, m1 * max(1, 32768 // m1), _round_up(M, m1)))
    m_pad = _round_up(M, t2)
    return m1, t2, m_pad


# ----------------------------- wrapper --------------------------------------


def factorized_reduce_nhwc(x_nhwc, w1, w2, gamma, beta, *, stride, eps=1e-5,
                           m_tile=None, compute_dtype=None, y_dtype=None,
                           out_dtype=None):
    """Core implementation on channels-last (NHWC) activations.

    x_nhwc: (N, H, W, C_in).  w1, w2: (C_out//2, C_in, 1, 1).  Returns NHWC.
    On v6e/v7x, pass compute_dtype=jnp.bfloat16 to roughly halve the streamed
    HBM bytes (MXU still accumulates in f32; numerics loosen to ~1e-2 level).
    """
    N, H, W, C_in = x_nhwc.shape
    C_half = w1.shape[0]
    C_out = 2 * C_half

    if compute_dtype is None:
        compute_dtype = x_nhwc.dtype
    if y_dtype is None:
        y_dtype = compute_dtype
    if out_dtype is None:
        out_dtype = x_nhwc.dtype

    # Strided spatial samplings (cheap NHWC slices).
    # TODO(synk): fold these (and the dtype cast / row padding below) into the
    # kernel via an ANY-space input + strided DMA to kill the XLA glue passes.
    x1 = x_nhwc[:, ::stride, ::stride, :]                  # path 1: offset (0, 0)
    x2 = x_nhwc[:, 1::stride, 1::stride, :]                # path 2: offset (1, 1)
    Ho, Wo = x1.shape[1], x1.shape[2]
    assert x2.shape[1] == Ho and x2.shape[2] == Wo, (
        "concat requires both conv paths to have equal spatial dims")
    M = N * Ho * Wo

    in_bytes = jnp.dtype(compute_dtype).itemsize
    y_bytes = jnp.dtype(y_dtype).itemsize
    o_bytes = jnp.dtype(out_dtype).itemsize
    gran = 16 if min(in_bytes, y_bytes, o_bytes) < 4 else 8   # bf16 -> 16-row tiles
    vmem_limit = _vmem_limit_bytes()
    row1 = 2 * C_in * in_bytes + C_out * y_bytes
    row2 = C_out * (y_bytes + o_bytes)
    m1, m2, M_pad = _pick_tiles(M, row1, row2, gran, m_tile, vmem_limit)
    n1, n2 = M_pad // m1, M_pad // m2

    x1m = _pad_rows(x1.reshape(M, C_in).astype(compute_dtype), M_pad)
    x2m = _pad_rows(x2.reshape(M, C_in).astype(compute_dtype), M_pad)
    w1m = w1.reshape(C_half, C_in).T.astype(compute_dtype)   # (C_in, C_half)
    w2m = w2.reshape(C_half, C_in).T.astype(compute_dtype)

    cparams = pltpu.CompilerParams(dimension_semantics=("parallel",),
                                   vmem_limit_bytes=vmem_limit)

    # Pass 1: relu + 1x1 convs; pre-norm y + per-tile partial (sum, sum_sq).
    y_pre, partials = pl.pallas_call(
        _stats_kernel,
        out_shape=(
            jax.ShapeDtypeStruct((M_pad, C_out), y_dtype),
            jax.ShapeDtypeStruct((n1, 1, 2 * C_out), jnp.float32),
        ),
        grid_spec=pltpu.PrefetchScalarGridSpec(
            num_scalar_prefetch=0,
            grid=(n1,),
            in_specs=[
                pl.BlockSpec((m1, C_in), lambda i: (i, 0)),
                pl.BlockSpec((m1, C_in), lambda i: (i, 0)),
                pl.BlockSpec((C_in, C_half), lambda i: (0, 0)),
                pl.BlockSpec((C_in, C_half), lambda i: (0, 0)),
            ],
            out_specs=[
                pl.BlockSpec((m1, C_out), lambda i: (i, 0)),
                pl.BlockSpec((1, 1, 2 * C_out), lambda i: (i, 0, 0)),
            ],
        ),
        compiler_params=cparams,
    )(x1m, x2m, w1m, w2m)

    # Tiny per-channel glue: combine partials, fold BN into scale/shift.
    # Padded rows are exact zeros (relu(0)=0, conv(0)=0) so they contribute
    # nothing; true M is the correct normalizer.
    sums = jnp.sum(partials, axis=(0, 1))                     # (2*C_out,)
    mean = sums[:C_out] / M
    var = jnp.maximum(sums[C_out:] / M - mean * mean, 0.0)    # biased variance
    inv_std = jax.lax.rsqrt(var + eps)
    g = gamma.astype(jnp.float32).reshape(C_out)
    b = beta.astype(jnp.float32).reshape(C_out)
    scale = (g * inv_std).reshape(1, C_out)
    shift = (b - mean * g * inv_std).reshape(1, C_out)

    # Pass 2: elementwise normalize with its own (fatter) tile; alias y_pre as
    # the output buffer when dtypes allow to drop one (M_pad, C_out) HBM alloc.
    alias = {0: 0} if jnp.dtype(y_dtype) == jnp.dtype(out_dtype) else {}
    out_pad = pl.pallas_call(
        _normalize_kernel,
        out_shape=jax.ShapeDtypeStruct((M_pad, C_out), out_dtype),
        grid_spec=pltpu.PrefetchScalarGridSpec(
            num_scalar_prefetch=0,
            grid=(n2,),
            in_specs=[
                pl.BlockSpec((m2, C_out), lambda i: (i, 0)),
                pl.BlockSpec((1, C_out), lambda i: (0, 0)),
                pl.BlockSpec((1, C_out), lambda i: (0, 0)),
            ],
            out_specs=pl.BlockSpec((m2, C_out), lambda i: (i, 0)),
        ),
        compiler_params=cparams,
        input_output_aliases=alias,
    )(y_pre, scale, shift)

    return out_pad[:M].reshape(N, Ho, Wo, C_out)


def factorized_reduce(x, w1, w2, gamma, beta, *, stride, eps=1e-5,
                      m_tile=None, compute_dtype=None, y_dtype=None):
    """NCHW interface matching the PyTorch module. x: (N, C_in, H, W)."""
    # TODO(synk): if the surrounding network keeps NHWC activations, call
    # factorized_reduce_nhwc directly and drop these two boundary transposes.
    x_nhwc = jnp.transpose(x, (0, 2, 3, 1))
    out_nhwc = factorized_reduce_nhwc(
        x_nhwc, w1, w2, gamma, beta, stride=stride, eps=eps, m_tile=m_tile,
        compute_dtype=compute_dtype, y_dtype=y_dtype, out_dtype=x.dtype)
    return jnp.transpose(out_nhwc, (0, 3, 1, 2))


# ----------------------------- reference ------------------------------------


def _reference(x, w1, w2, gamma, beta, *, stride, eps=1e-5):
    """Pure-JAX reference mirroring the PyTorch module (training-mode BN)."""
    xr = jnp.maximum(x, 0.0)
    dn = ("NCHW", "OIHW", "NCHW")
    y1 = jax.lax.conv_general_dilated(xr, w1, (stride, stride), "VALID",
                                      dimension_numbers=dn)
    y2 = jax.lax.conv_general_dilated(xr[:, :, 1:, 1:], w2, (stride, stride),
                                      "VALID", dimension_numbers=dn)
    y = jnp.concatenate([y1, y2], axis=1)
    mean = jnp.mean(y, axis=(0, 2, 3), keepdims=True)
    var = jnp.mean((y - mean) ** 2, axis=(0, 2, 3), keepdims=True)
    y_hat = (y - mean) / jnp.sqrt(var + eps)
    return y_hat * gamma.reshape(1, -1, 1, 1) + beta.reshape(1, -1, 1, 1)


if __name__ == "__main__":
    # Small shapes consistent with the module: N=2, C_in=4, H=W=16, stride=2,
    # C_out=8 (must be even).  NOTE: C_out=8 is far below the 128-lane width,
    # so stores are masked — don't use this toy shape for benchmarking.
    N, C_in, H, W = 2, 4, 16, 16
    C_out, stride = 8, 2
    C_half = C_out // 2

    key = jax.random.PRNGKey(0)
    kx, k1, k2, kg, kb = jax.random.split(key, 5)
    x = jax.random.normal(kx, (N, C_in, H, W), dtype=jnp.float32)
    w1 = jax.random.normal(k1, (C_half, C_in, 1, 1), dtype=jnp.float32) * 0.5
    w2 = jax.random.normal(k2, (C_half, C_in, 1, 1), dtype=jnp.float32) * 0.5
    gamma = 1.0 + 0.1 * jax.random.normal(kg, (C_out,), dtype=jnp.float32)
    beta = 0.1 * jax.random.normal(kb, (C_out,), dtype=jnp.float32)

    ref = _reference(x, w1, w2, gamma, beta, stride=stride)

    # Small m_tile -> 2 pass-1 grid steps (exercises the multi-tile partial
    # stats path) with a decoupled, larger pass-2 tile.
    out = jax.block_until_ready(
        factorized_reduce(x, w1, w2, gamma, beta, stride=stride, m_tile=64))
    assert out.shape == (N, C_out, H // stride, W // stride), out.shape
    err = float(jnp.max(jnp.abs(out - ref)))
    assert err < 2e-4, ("m_tile=64", err)

    # Default (VMEM-budget-driven) tile selection: single tile at this tiny M.
    out = jax.block_until_ready(
        factorized_reduce(x, w1, w2, gamma, beta, stride=stride))
    err = float(jnp.max(jnp.abs(out - ref)))
    assert err < 2e-4, ("default", err)

    # bf16 streamed activations + bf16 y intermediate (recommended on v6e/v7x
    # where the op is HBM-bound): f32 MXU accumulation and f32 BN stats, so
    # only per-element rounding loosens vs. the f32 reference (~1e-2 level).
    out_bf = jax.block_until_ready(
        factorized_reduce(x, w1, w2, gamma, beta, stride=stride,
                          compute_dtype=jnp.bfloat16))
    err_bf = float(jnp.max(jnp.abs(out_bf - ref)))
    assert err_bf < 1e-1, ("bf16", err_bf)

    print("KERNEL_OK")
</pallas_src>

<mosaic_0001>
module attributes {stable_mosaic.version = 11 : i64} {
  func.func @_stats_kernel(%arg0: i32, %arg1: memref<64x4xf32, #tpu.memory_space<vmem>>, %arg2: memref<64x4xf32, #tpu.memory_space<vmem>>, %arg3: memref<4x4xf32, #tpu.memory_space<vmem>>, %arg4: memref<4x4xf32, #tpu.memory_space<vmem>>, %arg5: memref<64x8xf32, #tpu.memory_space<vmem>>, %arg6: memref<1x1x16xf32, #tpu.memory_space<vmem>>) attributes {dimension_semantics = [#tpu.dimension_semantics<parallel>], iteration_bounds = array<i64: 2>, scalar_prefetch = 0 : i64, scratch_operands = 0 : i64, tpu.core_type = #tpu.core_type<tc>, window_params = [{transform_indices = @transform_0, window_bounds = array<i64: 64, 4>}, {transform_indices = @transform_1, window_bounds = array<i64: 64, 4>}, {pipeline_mode = #tpu.pipeline_mode<synchronous>, transform_indices = @transform_2, window_bounds = array<i64: 4, 4>}, {pipeline_mode = #tpu.pipeline_mode<synchronous>, transform_indices = @transform_3, window_bounds = array<i64: 4, 4>}, {transform_indices = @transform_4, window_bounds = array<i64: 64, 8>}, {transform_indices = @transform_5, window_bounds = array<i64: 1, 1, 16>}]} {
    %c0 = arith.constant 0 : index
    %c0_0 = arith.constant 0 : index
    %0 = vector.load %arg1[%c0, %c0_0] : memref<64x4xf32, #tpu.memory_space<vmem>>, vector<64x4xf32>
    %cst = arith.constant 0.000000e+00 : f32
    %1 = vector.broadcast %cst : f32 to vector<64x4xf32>
    %2 = arith.maximumf %0, %1 : vector<64x4xf32>
    %c0_1 = arith.constant 0 : index
    %c0_2 = arith.constant 0 : index
    %3 = vector.load %arg3[%c0_1, %c0_2] : memref<4x4xf32, #tpu.memory_space<vmem>>, vector<4x4xf32>
    %cst_3 = arith.constant dense<0.000000e+00> : vector<64x4xf32>
    %4 = tpu.matmul %2, %3, %cst_3 {dimension_numbers = #tpu.dot_dimension_numbers<[1], [0], [0], [1], [0, 0, 1, 1], [], []>} : vector<64x4xf32>, vector<4x4xf32>, vector<64x4xf32> -> vector<64x4xf32>
    %c0_4 = arith.constant 0 : index
    %c0_5 = arith.constant 0 : index
    %5 = vector.load %arg2[%c0_4, %c0_5] : memref<64x4xf32, #tpu.memory_space<vmem>>, vector<64x4xf32>
    %cst_6 = arith.constant 0.000000e+00 : f32
    %6 = vector.broadcast %cst_6 : f32 to vector<64x4xf32>
    %7 = arith.maximumf %5, %6 : vector<64x4xf32>
    %c0_7 = arith.constant 0 : index
    %c0_8 = arith.constant 0 : index
    %8 = vector.load %arg4[%c0_7, %c0_8] : memref<4x4xf32, #tpu.memory_space<vmem>>, vector<4x4xf32>
    %cst_9 = arith.constant dense<0.000000e+00> : vector<64x4xf32>
    %9 = tpu.matmul %7, %8, %cst_9 {dimension_numbers = #tpu.dot_dimension_numbers<[1], [0], [0], [1], [0, 0, 1, 1], [], []>} : vector<64x4xf32>, vector<4x4xf32>, vector<64x4xf32> -> vector<64x4xf32>
    %10 = tpu.concatenate %4, %9 in 1 : vector<64x4xf32>, vector<64x4xf32> -> vector<64x8xf32>
    %cst_10 = arith.constant dense<0.000000e+00> : vector<8xf32>
    %11 = vector.multi_reduction <add>, %10, %cst_10 [0] : vector<64x8xf32> to vector<8xf32>
    %12 = vector.shape_cast %11 : vector<8xf32> to vector<1x8xf32>
    %13 = arith.mulf %10, %10 : vector<64x8xf32>
    %cst_11 = arith.constant dense<0.000000e+00> : vector<8xf32>
    %14 = vector.multi_reduction <add>, %13, %cst_11 [0] : vector<64x8xf32> to vector<8xf32>
    %15 = vector.shape_cast %14 : vector<8xf32> to vector<1x8xf32>
    %16 = tpu.concatenate %12, %15 in 1 : vector<1x8xf32>, vector<1x8xf32> -> vector<1x16xf32>
    %c0_12 = arith.constant 0 : index
    %c0_13 = arith.constant 0 : index
    %c0_14 = arith.constant 0 : index
    %17 = vector.load %arg6[%c0_12, %c0_13, %c0_14] : memref<1x1x16xf32, #tpu.memory_space<vmem>>, vector<1x1x16xf32>
    %18 = vector.shape_cast %17 : vector<1x1x16xf32> to vector<1x16xf32>
    %19 = vector.shape_cast %16 : vector<1x16xf32> to vector<1x1x16xf32>
    tpu.vector_store %arg6[%c0_12, %c0_13, %c0_14], %19 {strides = array<i32>} : memref<1x1x16xf32, #tpu.memory_space<vmem>>, vector<1x1x16xf32>,
    %c0_15 = arith.constant 0 : index
    %c0_16 = arith.constant 0 : index
    %20 = vector.load %arg5[%c0_15, %c0_16] : memref<64x8xf32, #tpu.memory_space<vmem>>, vector<64x8xf32>
    tpu.vector_store %arg5[%c0_15, %c0_16], %10 {strides = array<i32>} : memref<64x8xf32, #tpu.memory_space<vmem>>, vector<64x8xf32>,
    return
  }
  func.func @transform_0(%arg0: i32) -> (i32, i32) {
    %c0_i32 = arith.constant 0 : i32
    %c0_i32_0 = arith.constant 0 : i32
    return %arg0, %c0_i32 : i32, i32
  }
  func.func @transform_1(%arg0: i32) -> (i32, i32) {
    %c0_i32 = arith.constant 0 : i32
    %c0_i32_0 = arith.constant 0 : i32
    return %arg0, %c0_i32 : i32, i32
  }
  func.func @transform_2(%arg0: i32) -> (i32, i32) {
    %c0_i32 = arith.constant 0 : i32
    %c0_i32_0 = arith.constant 0 : i32
    %c0_i32_1 = arith.constant 0 : i32
    return %c0_i32, %c0_i32_0 : i32, i32
  }
  func.func @transform_3(%arg0: i32) -> (i32, i32) {
    %c0_i32 = arith.constant 0 : i32
    %c0_i32_0 = arith.constant 0 : i32
    %c0_i32_1 = arith.constant 0 : i32
    return %c0_i32, %c0_i32_0 : i32, i32
  }
  func.func @transform_4(%arg0: i32) -> (i32, i32) {
    %c0_i32 = arith.constant 0 : i32
    %c0_i32_0 = arith.constant 0 : i32
    return %arg0, %c0_i32 : i32, i32
  }
  func.func @transform_5(%arg0: i32) -> (i32, i32, i32) {
    %c0_i32 = arith.constant 0 : i32
    %c0_i32_0 = arith.constant 0 : i32
    %c0_i32_1 = arith.constant 0 : i32
    return %arg0, %c0_i32, %c0_i32_0 : i32, i32, i32
  }
}

</mosaic_0001>

<llo_original>
// kernel: tpu_custom_call.1
$region0: #{tpu_custom_call.1}
  #allocation0 [shape = 'u32[]', space=smem, size = 0x4, offset = 0x4, fixed_abs, tag = 'smem constant byte address 0x4 - core index']
  #allocation1 [shape = 'u32[144,128]{1,0:T(1,128)}', space=vmem, size = 0x12000, scoped, tag = 'internal scratch']
  %s0 = inlined_call_operand.vmem [shape: f32[128,4], index: 0, kind: input, shape index: {}]
  %s1 = inlined_call_operand.vmem [shape: f32[128,4], index: 1, kind: input, shape index: {}]
  %s2 = inlined_call_operand.vmem [shape: f32[4,4], index: 2, kind: input, shape index: {}]
  %s3 = inlined_call_operand.vmem [shape: f32[4,4], index: 3, kind: input, shape index: {}]
  %s4 = inlined_call_operand.vmem [shape: f32[128,8], index: 4, kind: output, shape index: {0}]
  %s5 = inlined_call_operand.hbm [shape: f32[2,1,16], index: 5, kind: output, shape index: {1}]
  %6 = xla_tuple %s4, %s5
  %s7 = sld [smem:[#allocation0]]
  $region57: #{tpu_custom_call.1} parent=0
    _
  %s9 = ssub.s32 1, %s7
  %s10 = scalar_select 0, %s9, %s7
  $region1: #{tpu_custom_call.1} parent=0
    #allocation2 [shape = 'u8[1024]{0}', space=vmem, size = 0x400, scoped, tag = 'output window, operand 1']
    #allocation3 [shape = 's32[2]{0}', space=sflag, size = 0x8, scoped, tag = 'scoped memory for tpu_custom_call.1']
    %11 = vsyncpa [#allocation3], 0
    %s12 = scalar_lea.sflag [#allocation3], 1
    %13 = vsyncpa %s12, 0
    loop: start=0, step=1, limit=4
    $region2: #{tpu_custom_call.1} parent=1 // loop_pre_header
      _
    $region3: #{tpu_custom_call.1} parent=1 // loop_header
      %s15 = sphi 0, %s19
      %p16 = scmp.ge.s32.totalorder %s15, 4
      %s25 = sphi 0, %s27
      %s28 = sphi 0, %s25
      %s29 = sphi 0, %s28
      %s45 = sphi 0, %s29
      %s51 = sphi 0, %s53
      %s54 = sphi 0, %s51
      %s55 = sphi 0, %s54
      %s71 = sphi 0, %s55
      %s75 = sphi 0, %s75
      %s77 = sphi 0, %s75
      %s78 = sphi 0, %s77
      %s92 = sphi 0, %s78
      %s96 = sphi 0, %s96
      %s98 = sphi 0, %s96
      %s99 = sphi 0, %s98
      %s113 = sphi 0, %s99
      %s119 = sphi 0, %s121
      %s122 = sphi 0, %s119
      %s123 = sphi 0, %s122
      %s139 = sphi 0, %s123
      %s145 = sphi 0, %s147
      %s148 = sphi 0, %s145
      %s149 = sphi 0, %s148
      %s165 = sphi 0, %s149
    $region4: #{tpu_custom_call.1} parent=1 // loop_header_branch
      %18 = sbr.rel (%p16) target = $region8
    $region5: #{tpu_custom_call.1} parent=1 // loop_body
      %s20 = ssub.s32 %s15, 1
      %s21 = ssub.s32 %s15, 2
      %s22 = sadd.s32 %s15, 1
      %s23 = ssub.s32 %s15, %s22
      %p24 = scmp.eq.s32.totalorder %s23, 0
      %s26 = sadd.s32 %s25, 1
      %s27 = scalar_select %p24, %s25, %s26
      %p30 = pneg %p24
      %p31 = scmp.eq.s32.totalorder %s15, 1
      %p32 = por %p30, %p31
      %p33 = scmp.ne.s32.totalorder %s25, %s28
      %p34 = scmp.eq.s32.totalorder %s15, 0
      %p35 = por %p33, %p34
      %p36 = scmp.ne.s32.totalorder %s25, %s28
      %p37 = scmp.eq.s32.totalorder %s20, 1
      %p38 = por %p36, %p37
      %p39 = scmp.ne.s32.totalorder %s28, %s29
      %p40 = scmp.eq.s32.totalorder %s20, 0
      %p41 = por %p39, %p40
      %p42 = scmp.ne.s32.totalorder %s28, %s29
      %p43 = scmp.eq.s32.totalorder %s21, 1
      %p44 = por %p42, %p43
      %p46 = scmp.ne.s32.totalorder %s29, %s45
      %p47 = scmp.eq.s32.totalorder %s21, 0
      %p48 = por %p46, %p47
      %s49 = ssub.s32 %s15, %s22
      %p50 = scmp.eq.s32.totalorder %s49, 0
      %s52 = sadd.s32 %s51, 1
      %s53 = scalar_select %p50, %s51, %s52
      %p56 = pneg %p50
      %p57 = scmp.eq.s32.totalorder %s15, 1
      %p58 = por %p56, %p57
      %p59 = scmp.ne.s32.totalorder %s51, %s54
      %p60 = scmp.eq.s32.totalorder %s15, 0
      %p61 = por %p59, %p60
      %p62 = scmp.ne.s32.totalorder %s51, %s54
      %p63 = scmp.eq.s32.totalorder %s20, 1
      %p64 = por %p62, %p63
      %p65 = scmp.ne.s32.totalorder %s54, %s55
      %p66 = scmp.eq.s32.totalorder %s20, 0
      %p67 = por %p65, %p66
      %p68 = scmp.ne.s32.totalorder %s54, %s55
      %p69 = scmp.eq.s32.totalorder %s21, 1
      %p70 = por %p68, %p69
      %p72 = scmp.ne.s32.totalorder %s55, %s71
      %p73 = scmp.eq.s32.totalorder %s21, 0
      %p74 = por %p72, %p73
      %s76 = sadd.s32 %s75, 1
      %p79 = scmp.eq.s32.totalorder %s15, 1
      %p80 = scmp.ne.s32.totalorder %s75, %s77
      %p81 = scmp.eq.s32.totalorder %s15, 0
      %p82 = por %p80, %p81
      %p83 = scmp.ne.s32.totalorder %s75, %s77
      %p84 = scmp.eq.s32.totalorder %s20, 1
      %p85 = por %p83, %p84
      %p86 = scmp.ne.s32.totalorder %s77, %s78
      %p87 = scmp.eq.s32.totalorder %s20, 0
      %p88 = por %p86, %p87
      %p89 = scmp.ne.s32.totalorder %s77, %s78
      %p90 = scmp.eq.s32.totalorder %s21, 1
      %p91 = por %p89, %p90
      %p93 = scmp.ne.s32.totalorder %s78, %s92
      %p94 = scmp.eq.s32.totalorder %s21, 0
      %p95 = por %p93, %p94
      %s97 = sadd.s32 %s96, 1
      %p100 = scmp.eq.s32.totalorder %s15, 1
      %p101 = scmp.ne.s32.totalorder %s96, %s98
      %p102 = scmp.eq.s32.totalorder %s15, 0
      %p103 = por %p101, %p102
      %p104 = scmp.ne.s32.totalorder %s96, %s98
      %p105 = scmp.eq.s32.totalorder %s20, 1
      %p106 = por %p104, %p105
      %p107 = scmp.ne.s32.totalorder %s98, %s99
      %p108 = scmp.eq.s32.totalorder %s20, 0
      %p109 = por %p107, %p108
      %p110 = scmp.ne.s32.totalorder %s98, %s99
      %p111 = scmp.eq.s32.totalorder %s21, 1
      %p112 = por %p110, %p111
      %p114 = scmp.ne.s32.totalorder %s99, %s113
      %p115 = scmp.eq.s32.totalorder %s21, 0
      %p116 = por %p114, %p115
      %s117 = ssub.s32 %s15, %s22
      %p118 = scmp.eq.s32.totalorder %s117, 0
      %s120 = sadd.s32 %s119, 1
      %s121 = scalar_select %p118, %s119, %s120
      %p124 = pneg %p118
      %p125 = scmp.eq.s32.totalorder %s15, 1
      %p126 = por %p124, %p125
      %p127 = scmp.ne.s32.totalorder %s119, %s122
      %p128 = scmp.eq.s32.totalorder %s15, 0
      %p129 = por %p127, %p128
      %p130 = scmp.ne.s32.totalorder %s119, %s122
      %p131 = scmp.eq.s32.totalorder %s20, 1
      %p132 = por %p130, %p131
      %p133 = scmp.ne.s32.totalorder %s122, %s123
      %p134 = scmp.eq.s32.totalorder %s20, 0
      %p135 = por %p133, %p134
      %p136 = scmp.ne.s32.totalorder %s122, %s123
      %p137 = scmp.eq.s32.totalorder %s21, 1
      %p138 = por %p136, %p137
      %p140 = scmp.ne.s32.totalorder %s123, %s139
      %p141 = scmp.eq.s32.totalorder %s21, 0
      %p142 = por %p140, %p141
      %s143 = ssub.s32 %s15, %s22
      %p144 = scmp.eq.s32.totalorder %s143, 0
      %s146 = sadd.s32 %s145, 1
      %s147 = scalar_select %p144, %s145, %s146
      %p150 = pneg %p144
      %p151 = scmp.eq.s32.totalorder %s15, 1
      %p152 = por %p150, %p151
      %p153 = scmp.ne.s32.totalorder %s145, %s148
      %p154 = scmp.eq.s32.totalorder %s15, 0
      %p155 = por %p153, %p154
      %p156 = scmp.ne.s32.totalorder %s145, %s148
      %p157 = scmp.eq.s32.totalorder %s20, 1
      %p158 = por %p156, %p157
      %p159 = scmp.ne.s32.totalorder %s148, %s149
      %p160 = scmp.eq.s32.totalorder %s20, 0
      %p161 = por %p159, %p160
      %p162 = scmp.ne.s32.totalorder %s148, %s149
      %p163 = scmp.eq.s32.totalorder %s21, 1
      %p164 = por %p162, %p163
      %p166 = scmp.ne.s32.totalorder %s149, %s165
      %p167 = scmp.eq.s32.totalorder %s21, 0
      %p168 = por %p166, %p167
      %p169 = scmp.le.s32.totalorder 1, %s15
      %p170 = scmp.lt.s32.totalorder %s15, 3
      %p171 = pnand %p169, %p170
      %p172 = pneg %p171
      // Predicated region
      $region9: #{tpu_custom_call.1} parent=5 // pred_check
        _
      $region10: #{tpu_custom_call.1} parent=5 // pred_check_branch
        %174 = sbr.rel (%p171) target = $region12
      $region11: #{tpu_custom_call.1} parent=5 // pred_region
        %s175 = ssub.s32 %s15, 1
        // Predicated region
        $region13: #{tpu_custom_call.1} parent=11 // pred_check
          %p176 = pneg %p88
        $region14: #{tpu_custom_call.1} parent=11 // pred_check_branch
          %178 = sbr.rel (%p176) target = $region16
        $region15: #{tpu_custom_call.1} parent=11 // pred_region
          _
        $region16: #{tpu_custom_call.1} parent=11 // pred_fallthru
          _
        // Predicated region
        $region17: #{tpu_custom_call.1} parent=11 // pred_check
          %p179 = pneg %p109
        $region18: #{tpu_custom_call.1} parent=11 // pred_check_branch
          %181 = sbr.rel (%p179) target = $region20
        $region19: #{tpu_custom_call.1} parent=11 // pred_region
          _
        $region20: #{tpu_custom_call.1} parent=11 // pred_fallthru
          _
      $region12: #{tpu_custom_call.1} parent=5 // pred_fallthru
        _
      %p182 = scmp.lt.s32.totalorder %s15, 2
      // Predicated region
      $region21: #{tpu_custom_call.1} parent=5 // pred_check
        %p183 = pneg %p182
      $region22: #{tpu_custom_call.1} parent=5 // pred_check_branch
        %185 = sbr.rel (%p183) target = $region24
      $region23: #{tpu_custom_call.1} parent=5 // pred_region
        // Predicated region
        $region25: #{tpu_custom_call.1} parent=23 // pred_check
          %p186 = pneg %p35
        $region26: #{tpu_custom_call.1} parent=23 // pred_check_branch
          %188 = sbr.rel (%p186) target = $region28
        $region27: #{tpu_custom_call.1} parent=23 // pred_region
          %s189 = smul.u32 8, %s15
          %p190 = scmp.lt.s32.totalorder %s189, 15
          %s191 = scalar_select %p190, %s189, 15
          %s192 = smul.addr %s191, 8
          %s193 = scalar_lea.vmem %s0, %s192
          %s194 = smul.u32 8, %s15
        $region28: #{tpu_custom_call.1} parent=23 // pred_fallthru
          _
        // Predicated region
        $region29: #{tpu_custom_call.1} parent=23 // pred_check
          %p195 = pneg %p61
        $region30: #{tpu_custom_call.1} parent=23 // pred_check_branch
          %197 = sbr.rel (%p195) target = $region32
        $region31: #{tpu_custom_call.1} parent=23 // pred_region
          %s198 = smul.u32 8, %s15
          %p199 = scmp.lt.s32.totalorder %s198, 15
          %s200 = scalar_select %p199, %s198, 15
          %s201 = smul.addr %s200, 8
          %s202 = scalar_lea.vmem %s1, %s201
          %s203 = smul.u32 8, %s15
        $region32: #{tpu_custom_call.1} parent=23 // pred_fallthru
          _
      $region24: #{tpu_custom_call.1} parent=5 // pred_fallthru
        _
      %p204 = scmp.le.s32.totalorder 1, %s15
      %p205 = scmp.lt.s32.totalorder %s15, 3
      %p206 = pnand %p204, %p205
      %p207 = pneg %p206
      // Predicated region
      $region33: #{tpu_custom_call.1} parent=5 // pred_check
        _
      $region34: #{tpu_custom_call.1} parent=5 // pred_check_branch
        %209 = sbr.rel (%p206) target = $region36
      $region35: #{tpu_custom_call.1} parent=5 // pred_region
        %s210 = ssub.s32 %s15, 1
        %s211 = smul.u32 8, %s20
        %p212 = scmp.lt.s32.totalorder %s211, 15
        %s213 = scalar_select %p212, %s211, 15
        %s214 = smul.addr %s213, 8
        %s215 = scalar_lea.vmem %s0, %s214
        %p216 = pneg %p41
        %p217 = pneg %p38
        %s218 = smul.u32 8, %s20
        %p219 = scmp.lt.s32.totalorder %s218, 15
        %s220 = scalar_select %p219, %s218, 15
        %s221 = smul.addr %s220, 8
        %s222 = scalar_lea.vmem %s1, %s221
        %p223 = pneg %p67
        %p224 = pneg %p64
        %p225 = pneg %p88
        %p226 = pneg %p85
        %p227 = pneg %p109
        %p228 = pneg %p106
        %p229 = pneg %p135
        %p230 = pneg %p132
        %s231 = smul.u32 8, %s20
        %p232 = scmp.lt.s32.totalorder %s231, 15
        %s233 = scalar_select %p232, %s231, 15
        %s234 = smul.addr %s233, 8
        %s235 = scalar_lea.vmem %s4, %s234
        %p236 = pneg %p161
        %p237 = pneg %p158
        %s238 = sand.u32 %s148, 1
        %s239 = scalar_lea.sflag [#allocation3], %s238
        %s240 = sand.u32 %s148, 1
        %s241 = scalar_lea.vmem [#allocation2], %s240
        %s242 = smul.u32 8, %s20
        %p243 = scmp.lt.s32.totalorder %s242, 15
        %s244 = scalar_select %p243, %s242, 15
        %s245 = smul.addr %s244, 8
        %s246 = scalar_lea.vmem %s0, %s245
        %s247 = smul.u32 8, %s20
        %s248 = smul.u32 8, %s20
        %p249 = scmp.lt.s32.totalorder %s248, 15
        %s250 = scalar_select %p249, %s248, 15
        %s251 = smul.addr %s250, 8
        %s252 = scalar_lea.vmem %s1, %s251
        %s253 = smul.u32 8, %s20
        %s254 = smul.u32 8, %s20
        %p255 = scmp.lt.s32.totalorder %s254, 15
        %s256 = scalar_select %p255, %s254, 15
        %s257 = smul.addr %s256, 8
        %s258 = scalar_lea.vmem %s4, %s257
        %s259 = smul.u32 8, %s20
        %v260 = vld [vmem:[%s246] sm:$0xff]
        %v261 = vld [vmem:[%s246 + $0x8] sm:$0xff]
        %v262 = vld [vmem:[%s246 + $0x10] sm:$0xff]
        %v263 = vld [vmem:[%s246 + $0x18] sm:$0xff]
        %v264 = vld [vmem:[%s246 + $0x20] sm:$0xff]
        %v265 = vld [vmem:[%s246 + $0x28] sm:$0xff]
        %v266 = vld [vmem:[%s246 + $0x30] sm:$0xff]
        %v267 = vld [vmem:[%s246 + $0x38] sm:$0xff]
        %v268 = vmax.f32 %v260, 0.0
        %v269 = vmax.f32 %v261, 0.0
        %v270 = vmax.f32 %v262, 0.0
        %v271 = vmax.f32 %v263, 0.0
        %v272 = vmax.f32 %v264, 0.0
        %v273 = vmax.f32 %v265, 0.0
        %v274 = vmax.f32 %v266, 0.0
        %v275 = vmax.f32 %v267, 0.0
        %v276 = vld [vmem:[%s2] sm:$0xf]
        %vm277 = vcmask 31744
        %v279 = vsel %vm277, %v268, 0
        %v282 = vsel %vm277, %v269, 0
        %v285 = vsel %vm277, %v270, 0
        %v288 = vsel %vm277, %v271, 0
        %v291 = vsel %vm277, %v272, 0
        %v294 = vsel %vm277, %v273, 0
        %v297 = vsel %vm277, %v274, 0
        %v300 = vsel %vm277, %v275, 0
        %vm302 = vcmask 1043456
        %v304 = vsel %vm302, %v276, 0
        %306 = vmatprep.subr.mxu0 0.0
        %307 = vmatpush1.msra.mxu0 0.0
        %308 = vmatprep.subr.mxu0 0.0
        %309 = vmatpush1.msra.mxu0 0.0
        %310 = vmatprep.subr.mxu0 0.0
        %311 = vmatpush1.msra.mxu0 0.0
        %312 = vmatprep.subr.mxu0 0.0
        %313 = vmatpush1.msra.mxu0 0.0
        %314 = vmatprep.subr.mxu0 0.0
        %315 = vmatpush1.msra.mxu0 0.0
        %316 = vmatprep.subr.mxu0 0.0
        %317 = vmatpush1.msra.mxu0 0.0
        %318 = vmatprep.subr.mxu0 0.0
        %319 = vmatpush1.msra.mxu0 0.0
        %320 = vmatprep.subr.mxu0 0.0
        %321 = vmatpush1.msra.mxu0 0.0
        %322 = vmatprep.subr.mxu0 0.0
        %323 = vmatpush1.msra.mxu0 0.0
        %324 = vmatprep.subr.mxu0 0.0
        %325 = vmatpush1.msra.mxu0 0.0
        %326 = vmatprep.subr.mxu0 0.0
        %327 = vmatpush1.msra.mxu0 0.0
        %328 = vmatprep.subr.mxu0 0.0
        %329 = vmatpush1.msra.mxu0 0.0
        %330 = vmatprep.subr.mxu0 0.0
        %331 = vmatpush1.msra.mxu0 0.0
        %332 = vmatprep.subr.mxu0 0.0
        %333 = vmatpush1.msra.mxu0 0.0
        %334 = vmatprep.subr.mxu0 0.0
        %335 = vmatpush1.msra.mxu0 0.0
        %336 = vmatprep.subr.mxu0 0.0
        %337 = vmatpush1.msra.mxu0 %v304
        %338 = vmatprep.subr.mxu0 0.0
        %339 = vmatpush2.msra.mxu0 0.0
        %340 = vmatprep.subr.mxu0 0.0
        %341 = vmatpush2.msra.mxu0 0.0
        %342 = vmatprep.subr.mxu0 0.0
        %343 = vmatpush2.msra.mxu0 0.0
        %344 = vmatprep.subr.mxu0 0.0
        %345 = vmatpush2.msra.mxu0 0.0
        %346 = vmatprep.subr.mxu0 0.0
        %347 = vmatpush2.msra.mxu0 0.0
        %348 = vmatprep.subr.mxu0 0.0
        %349 = vmatpush2.msra.mxu0 0.0
        %350 = vmatprep.subr.mxu0 0.0
        %351 = vmatpush2.msra.mxu0 0.0
        %352 = vmatprep.subr.mxu0 0.0
        %353 = vmatpush2.msra.mxu0 0.0
        %354 = vmatprep.subr.mxu0 0.0
        %355 = vmatpush2.msra.mxu0 0.0
        %356 = vmatprep.subr.mxu0 0.0
        %357 = vmatpush2.msra.mxu0 0.0
        %358 = vmatprep.subr.mxu0 0.0
        %359 = vmatpush2.msra.mxu0 0.0
        %360 = vmatprep.subr.mxu0 0.0
        %361 = vmatpush2.msra.mxu0 0.0
        %362 = vmatprep.subr.mxu0 0.0
        %363 = vmatpush2.msra.mxu0 0.0
        %364 = vmatprep.subr.mxu0 0.0
        %365 = vmatpush2.msra.mxu0 0.0
        %366 = vmatprep.subr.mxu0 0.0
        %367 = vmatpush2.msra.mxu0 0.0
        %368 = vmatprep.subr.mxu0 0.0
        %369 = vmatpush2.msra.mxu0 0.0
        %370 = vmatprep.mubr.f32.mxu0 0.0
        %371 = vmatmul.mubr.f32.gmra.mxu0 %v279
        %v372 = vpop.f32.mrf.mxu0
        %v373 = vadd.f32 0.0, %v372
        %v374 = vpop.f32.mrf.mxu0
        %375 = vmatprep.mubr.f32.mxu0 0.0
        %376 = vmatmul.mubr.f32.gmra.mxu0 %v282
        %v377 = vpop.f32.mrf.mxu0
        %v378 = vadd.f32 0.0, %v377
        %v379 = vpop.f32.mrf.mxu0
        %380 = vmatprep.mubr.f32.mxu0 0.0
        %381 = vmatmul.mubr.f32.gmra.mxu0 %v285
        %v382 = vpop.f32.mrf.mxu0
        %v383 = vadd.f32 0.0, %v382
        %v384 = vpop.f32.mrf.mxu0
        %385 = vmatprep.mubr.f32.mxu0 0.0
        %386 = vmatmul.mubr.f32.gmra.mxu0 %v288
        %v387 = vpop.f32.mrf.mxu0
        %v388 = vadd.f32 0.0, %v387
        %v389 = vpop.f32.mrf.mxu0
        %390 = vmatprep.mubr.f32.mxu0 0.0
        %391 = vmatmul.mubr.f32.gmra.mxu0 %v291
        %v392 = vpop.f32.mrf.mxu0
        %v393 = vadd.f32 0.0, %v392
        %v394 = vpop.f32.mrf.mxu0
        %395 = vmatprep.mubr.f32.mxu0 0.0
        %396 = vmatmul.mubr.f32.gmra.mxu0 %v294
        %v397 = vpop.f32.mrf.mxu0
        %v398 = vadd.f32 0.0, %v397
        %v399 = vpop.f32.mrf.mxu0
        %400 = vmatprep.mubr.f32.mxu0 0.0
        %401 = vmatmul.mubr.f32.gmra.mxu0 %v297
        %v402 = vpop.f32.mrf.mxu0
        %v403 = vadd.f32 0.0, %v402
        %v404 = vpop.f32.mrf.mxu0
        %405 = vmatprep.mubr.f32.mxu0 0.0
        %406 = vmatmul.mubr.f32.gmra.mxu0 %v300
        %v407 = vpop.f32.mrf.mxu0
        %v408 = vadd.f32 0.0, %v407
        %v409 = vpop.f32.mrf.mxu0
        %410 = vdwg.mxu0
        %v411 = vld [vmem:[%s252] sm:$0xff]
        %v412 = vld [vmem:[%s252 + $0x8] sm:$0xff]
        %v413 = vld [vmem:[%s252 + $0x10] sm:$0xff]
        %v414 = vld [vmem:[%s252 + $0x18] sm:$0xff]
        %v415 = vld [vmem:[%s252 + $0x20] sm:$0xff]
        %v416 = vld [vmem:[%s252 + $0x28] sm:$0xff]
        %v417 = vld [vmem:[%s252 + $0x30] sm:$0xff]
        %v418 = vld [vmem:[%s252 + $0x38] sm:$0xff]
        %v419 = vmax.f32 %v411, 0.0
        %v420 = vmax.f32 %v412, 0.0
        %v421 = vmax.f32 %v413, 0.0
        %v422 = vmax.f32 %v414, 0.0
        %v423 = vmax.f32 %v415, 0.0
        %v424 = vmax.f32 %v416, 0.0
        %v425 = vmax.f32 %v417, 0.0
        %v426 = vmax.f32 %v418, 0.0
        %v427 = vld [vmem:[%s3] sm:$0xf]
        %v429 = vsel %vm277, %v419, 0
        %v432 = vsel %vm277, %v420, 0
        %v435 = vsel %vm277, %v421, 0
        %v438 = vsel %vm277, %v422, 0
        %v441 = vsel %vm277, %v423, 0
        %v444 = vsel %vm277, %v424, 0
        %v447 = vsel %vm277, %v425, 0
        %v450 = vsel %vm277, %v426, 0
        %v453 = vsel %vm302, %v427, 0
        %455 = vmatprep.subr.mxu0 0.0
        %456 = vmatpush1.msra.mxu0 0.0
        %457 = vmatprep.subr.mxu0 0.0
        %458 = vmatpush1.msra.mxu0 0.0
        %459 = vmatprep.subr.mxu0 0.0
        %460 = vmatpush1.msra.mxu0 0.0
        %461 = vmatprep.subr.mxu0 0.0
        %462 = vmatpush1.msra.mxu0 0.0
        %463 = vmatprep.subr.mxu0 0.0
        %464 = vmatpush1.msra.mxu0 0.0
        %465 = vmatprep.subr.mxu0 0.0
        %466 = vmatpush1.msra.mxu0 0.0
        %467 = vmatprep.subr.mxu0 0.0
        %468 = vmatpush1.msra.mxu0 0.0
        %469 = vmatprep.subr.mxu0 0.0
        %470 = vmatpush1.msra.mxu0 0.0
        %471 = vmatprep.subr.mxu0 0.0
        %472 = vmatpush1.msra.mxu0 0.0
        %473 = vmatprep.subr.mxu0 0.0
        %474 = vmatpush1.msra.mxu0 0.0
        %475 = vmatprep.subr.mxu0 0.0
        %476 = vmatpush1.msra.mxu0 0.0
        %477 = vmatprep.subr.mxu0 0.0
        %478 = vmatpush1.msra.mxu0 0.0
        %479 = vmatprep.subr.mxu0 0.0
        %480 = vmatpush1.msra.mxu0 0.0
        %481 = vmatprep.subr.mxu0 0.0
        %482 = vmatpush1.msra.mxu0 0.0
        %483 = vmatprep.subr.mxu0 0.0
        %484 = vmatpush1.msra.mxu0 0.0
        %485 = vmatprep.subr.mxu0 0.0
        %486 = vmatpush1.msra.mxu0 %v453
        %487 = vmatprep.subr.mxu0 0.0
        %488 = vmatpush2.msra.mxu0 0.0
        %489 = vmatprep.subr.mxu0 0.0
        %490 = vmatpush2.msra.mxu0 0.0
        %491 = vmatprep.subr.mxu0 0.0
        %492 = vmatpush2.msra.mxu0 0.0
        %493 = vmatprep.subr.mxu0 0.0
        %494 = vmatpush2.msra.mxu0 0.0
        %495 = vmatprep.subr.mxu0 0.0
        %496 = vmatpush2.msra.mxu0 0.0
        %497 = vmatprep.subr.mxu0 0.0
        %498 = vmatpush2.msra.mxu0 0.0
        %499 = vmatprep.subr.mxu0 0.0
        %500 = vmatpush2.msra.mxu0 0.0
        %501 = vmatprep.subr.mxu0 0.0
        %502 = vmatpush2.msra.mxu0 0.0
        %503 = vmatprep.subr.mxu0 0.0
        %504 = vmatpush2.msra.mxu0 0.0
        %505 = vmatprep.subr.mxu0 0.0
        %506 = vmatpush2.msra.mxu0 0.0
        %507 = vmatprep.subr.mxu0 0.0
        %508 = vmatpush2.msra.mxu0 0.0
        %509 = vmatprep.subr.mxu0 0.0
        %510 = vmatpush2.msra.mxu0 0.0
        %511 = vmatprep.subr.mxu0 0.0
        %512 = vmatpush2.msra.mxu0 0.0
        %513 = vmatprep.subr.mxu0 0.0
        %514 = vmatpush2.msra.mxu0 0.0
        %515 = vmatprep.subr.mxu0 0.0
        %516 = vmatpush2.msra.mxu0 0.0
        %517 = vmatprep.subr.mxu0 0.0
        %518 = vmatpush2.msra.mxu0 0.0
        %519 = vmatprep.mubr.f32.mxu0 0.0
        %520 = vmatmul.mubr.f32.gmra.mxu0 %v429
        %v521 = vpop.f32.mrf.mxu0
        %v522 = vadd.f32 0.0, %v521
        %v523 = vpop.f32.mrf.mxu0
        %524 = vmatprep.mubr.f32.mxu0 0.0
        %525 = vmatmul.mubr.f32.gmra.mxu0 %v432
        %v526 = vpop.f32.mrf.mxu0
        %v527 = vadd.f32 0.0, %v526
        %v528 = vpop.f32.mrf.mxu0
        %529 = vmatprep.mubr.f32.mxu0 0.0
        %530 = vmatmul.mubr.f32.gmra.mxu0 %v435
        %v531 = vpop.f32.mrf.mxu0
        %v532 = vadd.f32 0.0, %v531
        %v533 = vpop.f32.mrf.mxu0
        %534 = vmatprep.mubr.f32.mxu0 0.0
        %535 = vmatmul.mubr.f32.gmra.mxu0 %v438
        %v536 = vpop.f32.mrf.mxu0
        %v537 = vadd.f32 0.0, %v536
        %v538 = vpop.f32.mrf.mxu0
        %539 = vmatprep.mubr.f32.mxu0 0.0
        %540 = vmatmul.mubr.f32.gmra.mxu0 %v441
        %v541 = vpop.f32.mrf.mxu0
        %v542 = vadd.f32 0.0, %v541
        %v543 = vpop.f32.mrf.mxu0
        %544 = vmatprep.mubr.f32.mxu0 0.0
        %545 = vmatmul.mubr.f32.gmra.mxu0 %v444
        %v546 = vpop.f32.mrf.mxu0
        %v547 = vadd.f32 0.0, %v546
        %v548 = vpop.f32.mrf.mxu0
        %549 = vmatprep.mubr.f32.mxu0 0.0
        %550 = vmatmul.mubr.f32.gmra.mxu0 %v447
        %v551 = vpop.f32.mrf.mxu0
        %v552 = vadd.f32 0.0, %v551
        %v553 = vpop.f32.mrf.mxu0
        %554 = vmatprep.mubr.f32.mxu0 0.0
        %555 = vmatmul.mubr.f32.gmra.mxu0 %v450
        %v556 = vpop.f32.mrf.mxu0
        %v557 = vadd.f32 0.0, %v556
        %v558 = vpop.f32.mrf.mxu0
        %559 = vdwg.mxu0
        %568 = vrot.lane.b32.xlu0 %v522, 4
        %v569 = vpop.permute.xlu0 %568
        %570 = vrot.lane.b32.xlu0 %v527, 4
        %v571 = vpop.permute.xlu0 %570
        %572 = vrot.lane.b32.xlu0 %v532, 4
        %v573 = vpop.permute.xlu0 %572
        %574 = vrot.lane.b32.xlu0 %v537, 4
        %v575 = vpop.permute.xlu0 %574
        %576 = vrot.lane.b32.xlu0 %v542, 4
        %v577 = vpop.permute.xlu0 %576
        %578 = vrot.lane.b32.xlu0 %v547, 4
        %v579 = vpop.permute.xlu0 %578
        %580 = vrot.lane.b32.xlu0 %v552, 4
        %v581 = vpop.permute.xlu0 %580
        %582 = vrot.lane.b32.xlu0 %v557, 4
        %v583 = vpop.permute.xlu0 %582
        %v592 = vsel %vm277, %v373, %v569
        %v593 = vsel %vm277, %v378, %v571
        %v594 = vsel %vm277, %v383, %v573
        %v595 = vsel %vm277, %v388, %v575
        %v596 = vsel %vm277, %v393, %v577
        %v597 = vsel %vm277, %v398, %v579
        %v598 = vsel %vm277, %v403, %v581
        %v599 = vsel %vm277, %v408, %v583
        %vm600 = vcmask 64512
        %v601 = vsel %vm600, %v592, 0.0
        %v602 = vsel %vm600, %v593, 0.0
        %v603 = vadd.f32 %v601, %v602
        %v604 = vsel %vm600, %v594, 0.0
        %v605 = vadd.f32 %v603, %v604
        %v606 = vsel %vm600, %v595, 0.0
        %v607 = vadd.f32 %v605, %v606
        %v608 = vsel %vm600, %v596, 0.0
        %v609 = vadd.f32 %v607, %v608
        %v610 = vsel %vm600, %v597, 0.0
        %v611 = vadd.f32 %v609, %v610
        %v612 = vsel %vm600, %v598, 0.0
        %v613 = vadd.f32 %v611, %v612
        %v614 = vsel %vm600, %v599, 0.0
        %v615 = vadd.f32 %v613, %v614
        %v616 = vrot.slane %v615, 4
        %v617 = vadd.f32 %v615, %v616
        %v618 = vrot.slane %v617, 2
        %v619 = vadd.f32 %v617, %v618
        %v620 = vrot.slane %v619, 1
        %v621 = vadd.f32 %v619, %v620
        %v622 = vmul.f32 %v592, %v592
        %v623 = vmul.f32 %v593, %v593
        %v624 = vmul.f32 %v594, %v594
        %v625 = vmul.f32 %v595, %v595
        %v626 = vmul.f32 %v596, %v596
        %v627 = vmul.f32 %v597, %v597
        %v628 = vmul.f32 %v598, %v598
        %v629 = vmul.f32 %v599, %v599
        %v630 = vsel %vm600, %v622, 0.0
        %v631 = vsel %vm600, %v623, 0.0
        %v632 = vadd.f32 %v630, %v631
        %v633 = vsel %vm600, %v624, 0.0
        %v634 = vadd.f32 %v632, %v633
        %v635 = vsel %vm600, %v625, 0.0
        %v636 = vadd.f32 %v634, %v635
        %v637 = vsel %vm600, %v626, 0.0
        %v638 = vadd.f32 %v636, %v637
        %v639 = vsel %vm600, %v627, 0.0
        %v640 = vadd.f32 %v638, %v639
        %v641 = vsel %vm600, %v628, 0.0
        %v642 = vadd.f32 %v640, %v641
        %v643 = vsel %vm600, %v629, 0.0
        %v644 = vadd.f32 %v642, %v643
        %v645 = vrot.slane %v644, 4
        %v646 = vadd.f32 %v644, %v645
        %v647 = vrot.slane %v646, 2
        %v648 = vadd.f32 %v646, %v647
        %v649 = vrot.slane %v648, 1
        %v650 = vadd.f32 %v648, %v649
        %652 = vrot.lane.b32.xlu0 %v650, 8
        %v653 = vpop.permute.xlu0 %652
        %v655 = vsel %vm600, %v621, %v653
        %vm656 = vcmask 122880
        %657 = vst.msk [vmem:[%s241] sm:$0x1] %vm656, %v655
        %658 = vst.msk [vmem:[%s258] sm:$0xff] %vm600, %v592
        %659 = vst.msk [vmem:[%s258 + $0x8] sm:$0xff] %vm600, %v593
        %660 = vst.msk [vmem:[%s258 + $0x10] sm:$0xff] %vm600, %v594
        %661 = vst.msk [vmem:[%s258 + $0x18] sm:$0xff] %vm600, %v595
        %662 = vst.msk [vmem:[%s258 + $0x20] sm:$0xff] %vm600, %v596
        %663 = vst.msk [vmem:[%s258 + $0x28] sm:$0xff] %vm600, %v597
        %664 = vst.msk [vmem:[%s258 + $0x30] sm:$0xff] %vm600, %v598
        %665 = vst.msk [vmem:[%s258 + $0x38] sm:$0xff] %vm600, %v599
        %s666 = smul.u32 8, %s20
        %p667 = scmp.lt.s32.totalorder %s666, 15
        %s668 = scalar_select %p667, %s666, 15
        %s669 = smul.addr %s668, 8
        %s670 = scalar_lea.vmem %s4, %s669
        %s671 = sand.u32 %s148, 1
        %s672 = scalar_lea.sflag [#allocation3], %s671
        %s673 = sand.u32 %s148, 1
        %s674 = scalar_lea.vmem [#allocation2], %s673
        // Predicated region
        $region37: #{tpu_custom_call.1} parent=35 // pred_check
          %p675 = pneg %p132
        $region38: #{tpu_custom_call.1} parent=35 // pred_check_branch
          %677 = sbr.rel (%p675) target = $region40
        $region39: #{tpu_custom_call.1} parent=35 // pred_region
          %s678 = smul.u32 8, %s20
        $region40: #{tpu_custom_call.1} parent=35 // pred_fallthru
          _
        // Predicated region
        $region41: #{tpu_custom_call.1} parent=35 // pred_check
          %p679 = pneg %p158
        $region42: #{tpu_custom_call.1} parent=35 // pred_check_branch
          %681 = sbr.rel (%p679) target = $region44
        $region43: #{tpu_custom_call.1} parent=35 // pred_region
          %s683 = ssub.s32 16, 16
          %684 = vsyncadd %s672, %s683
          %s685 = smul.addr %s20, 16
          %s686 = scalar_lea.hbm %s5, %s685
          %s688 = sshll.u32 %s674, 4
          %s689 = int_to_ptr.vmem [resolvable:$true] %s688
          %691 = dma.vmem_to_hbm [thread:$0]  %s689, 16, %s686, %s672
        $region44: #{tpu_custom_call.1} parent=35 // pred_fallthru
          _
      $region36: #{tpu_custom_call.1} parent=5 // pred_fallthru
        _
      %p692 = scmp.le.s32.totalorder 2, %s15
      // Predicated region
      $region45: #{tpu_custom_call.1} parent=5 // pred_check
        %p693 = pneg %p692
      $region46: #{tpu_custom_call.1} parent=5 // pred_check_branch
        %695 = sbr.rel (%p693) target = $region48
      $region47: #{tpu_custom_call.1} parent=5 // pred_region
        %s696 = ssub.s32 %s15, 2
        // Predicated region
        $region49: #{tpu_custom_call.1} parent=47 // pred_check
          %p697 = pneg %p138
        $region50: #{tpu_custom_call.1} parent=47 // pred_check_branch
          %699 = sbr.rel (%p697) target = $region52
        $region51: #{tpu_custom_call.1} parent=47 // pred_region
          %s700 = smul.u32 8, %s21
          %p701 = scmp.lt.s32.totalorder %s700, 15
          %s702 = scalar_select %p701, %s700, 15
          %s703 = smul.addr %s702, 8
          %s704 = scalar_lea.vmem %s4, %s703
        $region52: #{tpu_custom_call.1} parent=47 // pred_fallthru
          _
        // Predicated region
        $region53: #{tpu_custom_call.1} parent=47 // pred_check
          %p705 = pneg %p164
        $region54: #{tpu_custom_call.1} parent=47 // pred_check_branch
          %707 = sbr.rel (%p705) target = $region56
        $region55: #{tpu_custom_call.1} parent=47 // pred_region
          %s708 = sand.u32 %s149, 1
          %s709 = scalar_lea.sflag [#allocation3], %s708
          %s710 = sand.u32 %s149, 1
          %s711 = scalar_lea.vmem [#allocation2], %s710
          %712 = dma.done %s709, 16
        $region56: #{tpu_custom_call.1} parent=47 // pred_fallthru
          _
      $region48: #{tpu_custom_call.1} parent=5 // pred_fallthru
        _
    $region6: #{tpu_custom_call.1} parent=1 // loop_footer
      %s19 = sadd.s32 1, %s15
    $region7: #{tpu_custom_call.1} parent=1 // loop_footer_branch
      %14 = sbr.rel target = $region3
    $region8: #{tpu_custom_call.1} parent=1 // loop_exit
      _
    %713 = vsyncpa [#allocation3], 1
    %s714 = scalar_lea.sflag [#allocation3], 1
    %715 = vsyncpa %s714, 1

</llo_original>
